<compile_context>
chip_gen: v7x
topology: tpu7x:2x2x1
jax: 0.10.0
libtpu: 0.0.40
codegen_flags: <defaults>
</compile_context>

<pallas_src>
import jax
import jax.numpy as jnp
from jax.experimental import pallas as pl
from jax.experimental.pallas import tpu as pltpu


_LANES = 128                       # TPU vreg lane width (4-byte lanes after packing)
_MAX_BLOCK_ROWS = 4096             # 2 MiB/buffer -> 85% HBM-roofline plateau (review #2)
_MIN_SPLIT_ROWS = 2048             # >=1 MiB of rows: force >=2 grid steps for v7x (review #4)
_SMALL_BYPASS_BYTES = 256 * 1024   # below this a pallas_call is pure overhead (review #6)


def _copy_kernel(src_ref, dst_ref):
    # context = encoder_out * alpha with alpha == 1 (size-1 softmax): a pure
    # lane-dense streaming copy that runs at the HBM roofline.
    dst_ref[...] = src_ref[...]


def _round_up(n, m):
    return ((n + m - 1) // m) * m


def _lane_dense_copy(x, *, force_kernel=False):
    """Materialize a fresh copy of `x` at (close to) HBM-roofline bandwidth.

    Only needed when the caller requires a distinct output buffer: for the
    degenerate 2-D forward, context == encoder_out exactly (review #1), so the
    small-input / unaligned fallbacks simply return `x` unchanged.
    """
    orig_shape, orig_dtype = x.shape, x.dtype
    itemsize = jnp.dtype(orig_dtype).itemsize
    nbytes = x.size * itemsize

    # Review #6: below a few hundred KiB the fixed launch + per-step overhead
    # dominates; skip the kernel (context == encoder_out anyway).
    if not force_kernel and nbytes < _SMALL_BYPASS_BYTES:
        return x

    flat = x.reshape(-1)
    if itemsize < 4:
        # Review #7: bitcast bf16 pairs / int8 quads into u32 so every lane of
        # every load/store moves a full 4 bytes.
        k = 4 // itemsize
        if flat.shape[0] % (k * _LANES) != 0:
            # Review #5: rather than masked vst.msk blocks, skip the copy.
            return x
        packed = jax.lax.bitcast_convert_type(flat.reshape(-1, k), jnp.uint32)
    else:
        if flat.shape[0] % _LANES != 0:
            return x  # review #5: unaligned tail -> zero-copy fallback
        packed = flat

    x2 = packed.reshape(-1, _LANES)          # (R, 128), always 4-byte lanes (review: #6 of v2)
    R = x2.shape[0]

    # Review #2/#4: biggest tile on the roofline plateau, but guarantee >= 2
    # grid steps for large inputs so v7x's two TensorCores both stream.
    n_steps = pl.cdiv(R, _MAX_BLOCK_ROWS)
    if R >= _MIN_SPLIT_ROWS:
        n_steps = max(2, n_steps)
    tr = R if n_steps == 1 else _round_up(pl.cdiv(R, n_steps), 8)
    grid = (pl.cdiv(R, tr),)

    out2 = pl.pallas_call(
        _copy_kernel,
        out_shape=jax.ShapeDtypeStruct((R, _LANES), x2.dtype),
        grid=grid,
        in_specs=[pl.BlockSpec((tr, _LANES), lambda i: (i, 0))],
        out_specs=pl.BlockSpec((tr, _LANES), lambda i: (i, 0)),
        compiler_params=pltpu.CompilerParams(
            # Batch/row grid is embarrassingly parallel -> shard across the two
            # TensorCores on v7x (no-op on single-TC v5e/v6e).
            dimension_semantics=("parallel",),
        ),
        # Review #8: pure streaming copy -- tell XLA it is bandwidth, not flops.
        cost_estimate=pl.CostEstimate(
            flops=0, transcendentals=0, bytes_accessed=2 * R * _LANES * 4),
    )(x2)

    if itemsize < 4:
        out = jax.lax.bitcast_convert_type(out2, orig_dtype)  # (R, 128, k)
        return out.reshape(orig_shape)
    return out2.reshape(orig_shape)


def bahdanau_attention(encoder_out, decoder_hidden, params, *,
                       materialize_context=False, force_kernel=False):
    """Forward pass matching the reference module for its documented 2-D inputs.

    Returns (context f32[B, E], alpha f32[B, 1]).

    For 2-D inputs the softmax axis has size 1, so alpha == 1 exactly and
    context == encoder_out bit-for-bit; decoder_hidden and the attention
    weights cannot affect the outputs.  By default (review #1) context is
    returned as encoder_out with zero extra HBM traffic; pass
    materialize_context=True when a distinct output buffer is required, which
    routes through the lane-dense Pallas copy kernel.
    """
    del decoder_hidden, params  # dead for the degenerate 2-D forward (see header)
    B, _ = encoder_out.shape
    if materialize_context:
        context = _lane_dense_copy(encoder_out, force_kernel=force_kernel)
    else:
        context = encoder_out  # review #1: bit-for-bit exact, zero extra traffic
    # softmax over a size-1 dim == 1.0 exactly; producing alpha in the wrapper
    # avoids a masked (B, 1) vst.msk store inside any kernel.
    alpha = jnp.ones((B, 1), encoder_out.dtype)
    return context, alpha


def init_params(key, encoder_dim, decoder_dim, attention_dim):
    """PyTorch-Linear-style init; weights stored as (in, out) so x @ W + b."""
    ks = jax.random.split(key, 6)

    def lin(kw, kb, fan_in, fan_out):
        bound = 1.0 / jnp.sqrt(jnp.float32(fan_in))
        w = jax.random.uniform(kw, (fan_in, fan_out), jnp.float32, -bound, bound)
        b = jax.random.uniform(kb, (1, fan_out), jnp.float32, -bound, bound)
        return w, b

    we, be = lin(ks[0], ks[1], encoder_dim, attention_dim)
    wd, bd = lin(ks[2], ks[3], decoder_dim, attention_dim)
    wf, bf = lin(ks[4], ks[5], attention_dim, 1)
    return {"we": we, "be": be, "wd": wd, "bd": bd, "wf": wf, "bf": bf}


def _fused_score_params(p):
    """Weight layout for the future 3-D variant (review #9): one K=(E+D) MXU
    pass with pre-added biases, and full_att as a (1, A) row so the N=1
    projection is a VPU multiply + lane reduce rather than an MXU matmul."""
    return {
        "w_cat": jnp.concatenate([p["we"], p["wd"]], axis=0),  # (E+D, A)
        "b_cat": p["be"] + p["bd"],                            # (1, A)
        "wf_row": p["wf"].T,                                   # (1, A)
        "bf": p["bf"],                                         # (1, 1)
    }


def _reference(encoder_out, decoder_hidden, p):
    """Pure-JAX transcription of the PyTorch forward (docstring 2-D shapes)."""
    att1 = encoder_out @ p["we"] + p["be"]
    att2 = decoder_hidden @ p["wd"] + p["bd"]
    att = jnp.maximum(att1 + att2, 0.0) @ p["wf"] + p["bf"]    # (B, 1)
    alpha = jax.nn.softmax(att, axis=1)                        # size-1 axis -> ones
    return encoder_out * alpha, alpha


def _reference_fused(encoder_out, decoder_hidden, p):
    """Same math via the fused layout (review #9); validated below."""
    f = _fused_score_params(p)
    x = jnp.concatenate([encoder_out, decoder_hidden], axis=1)           # (B, E+D)
    h = jnp.maximum(x @ f["w_cat"] + f["b_cat"], 0.0)                    # (B, A)
    att = jnp.sum(h * f["wf_row"], axis=-1, keepdims=True) + f["bf"]     # (B, 1)
    alpha = jax.nn.softmax(att, axis=1)
    return encoder_out * alpha, alpha


if __name__ == "__main__":
    B, ENC, DEC, ATT = 8, 32, 48, 64

    key = jax.random.PRNGKey(0)
    k_enc, k_dec, k_par = jax.random.split(key, 3)

    encoder_out = jax.random.normal(k_enc, (B, ENC), jnp.float32)
    decoder_hidden = jax.random.normal(k_dec, (B, DEC), jnp.float32)
    params = init_params(k_par, ENC, DEC, ATT)

    # Default fast path (review #1): context is encoder_out, zero HBM traffic.
    context, alpha = bahdanau_attention(encoder_out, decoder_hidden, params)

    # Distinct-buffer path: exercises the lane-dense Pallas copy kernel
    # (force_kernel bypasses the small-input shortcut at these test shapes).
    context_k, alpha_k = bahdanau_attention(
        encoder_out, decoder_hidden, params,
        materialize_context=True, force_kernel=True)

    # bf16 path exercises the u32 bitcast packing (review #7).
    enc_bf16 = encoder_out.astype(jnp.bfloat16)
    ctx_bf16 = _lane_dense_copy(enc_bf16, force_kernel=True)

    jax.block_until_ready((context, alpha, context_k, alpha_k, ctx_bf16))

    ref_ctx, ref_alpha = _reference(encoder_out, decoder_hidden, params)
    fus_ctx, fus_alpha = _reference_fused(encoder_out, decoder_hidden, params)

    assert context.shape == (B, ENC) and alpha.shape == (B, 1)
    # Constant fold is exact: both paths match the full-math reference.
    assert jnp.allclose(context, ref_ctx, atol=1e-6, rtol=1e-6)
    assert jnp.allclose(alpha, ref_alpha, atol=1e-6, rtol=1e-6)
    assert jnp.allclose(context_k, ref_ctx, atol=1e-6, rtol=1e-6)
    assert jnp.allclose(alpha_k, ref_alpha, atol=1e-6, rtol=1e-6)
    # bf16 copy (bitcast-packed path) is bit-for-bit.
    assert jnp.array_equal(ctx_bf16, enc_bf16)
    # Fused score layout for the future 3-D variant is numerically equivalent.
    assert jnp.allclose(fus_ctx, ref_ctx, atol=1e-5, rtol=1e-5)
    assert jnp.allclose(fus_alpha, ref_alpha, atol=1e-5, rtol=1e-5)

    print("KERNEL_OK")
</pallas_src>

<mosaic_0001>
module attributes {stable_mosaic.version = 11 : i64} {
  func.func @_copy_kernel(%arg0: i32, %arg1: memref<2x128xf32, #tpu.memory_space<vmem>>, %arg2: memref<2x128xf32, #tpu.memory_space<vmem>>) attributes {dimension_semantics = [#tpu.dimension_semantics<parallel>], iteration_bounds = array<i64: 1>, scalar_prefetch = 0 : i64, scratch_operands = 0 : i64, tpu.core_type = #tpu.core_type<tc>, window_params = [{transform_indices = @transform_0, window_bounds = array<i64: 2, 128>}, {transform_indices = @transform_1, window_bounds = array<i64: 2, 128>}]} {
    %c0 = arith.constant 0 : index
    %c0_0 = arith.constant 0 : index
    %0 = vector.load %arg1[%c0, %c0_0] : memref<2x128xf32, #tpu.memory_space<vmem>>, vector<2x128xf32>
    %c0_1 = arith.constant 0 : index
    %c0_2 = arith.constant 0 : index
    %1 = vector.load %arg2[%c0_1, %c0_2] : memref<2x128xf32, #tpu.memory_space<vmem>>, vector<2x128xf32>
    tpu.vector_store %arg2[%c0_1, %c0_2], %0 {strides = array<i32>} : memref<2x128xf32, #tpu.memory_space<vmem>>, vector<2x128xf32>,
    return
  }
  func.func @transform_0(%arg0: i32) -> (i32, i32) {
    %c0_i32 = arith.constant 0 : i32
    %c0_i32_0 = arith.constant 0 : i32
    return %arg0, %c0_i32 : i32, i32
  }
  func.func @transform_1(%arg0: i32) -> (i32, i32) {
    %c0_i32 = arith.constant 0 : i32
    %c0_i32_0 = arith.constant 0 : i32
    return %arg0, %c0_i32 : i32, i32
  }
}

</mosaic_0001>

<llo_original>
// kernel: tpu_custom_call.1
$region0: #{tpu_custom_call.1}
  #allocation0 [shape = 'u32[]', space=smem, size = 0x4, offset = 0x4, fixed_abs, tag = 'smem constant byte address 0x4 - core index']
  #allocation1 [shape = 'u32[144,128]{1,0:T(1,128)}', space=vmem, size = 0x12000, scoped, tag = 'internal scratch']
  %s0 = inlined_call_operand.hbm [shape: f32[2,128], index: 0, kind: input, shape index: {}]
  %s1 = inlined_call_operand.hbm [shape: f32[2,128], index: 1, kind: output, shape index: {}]
  %s2 = sld [smem:[#allocation0]]
  $region18: #{tpu_custom_call.1} parent=0
    _
  %s4 = ssub.s32 1, %s2
  %s5 = scalar_select 0, %s4, %s2
  $region1: #{tpu_custom_call.1} parent=0
    #allocation2 [shape = 'u8[1024]{0}', space=vmem, size = 0x400, scoped, tag = 'input window, operand 0, single buffered']
    #allocation3 [shape = 's32[1]{0}', space=sflag, size = 0x4, scoped, tag = 'scoped memory for tpu_custom_call.1']
    #allocation4 [shape = 's32[1]{0}', space=sflag, size = 0x4, scoped, tag = 'scoped memory for tpu_custom_call.1']
    #allocation5 [shape = 'u8[1024]{0}', space=vmem, size = 0x400, scoped, tag = 'output window, operand 0, single buffered']
    %6 = vsyncpa [#allocation3], 0
    %7 = vsyncpa [#allocation4], 0
    // Predicated region
    $region2: #{tpu_custom_call.1} parent=1 // pred_check
      _
    $region3: #{tpu_custom_call.1} parent=1 // pred_check_branch
      %9 = sbr.rel (0) target = $region5
    $region4: #{tpu_custom_call.1} parent=1 // pred_region
      %s11 = ssub.s32 32, 32
      %12 = vsyncadd [#allocation3], %s11
      %s14 = sshll.u32 [#allocation2], 4
      %s15 = int_to_ptr.vmem [resolvable:$true] %s14
      %17 = dma.hbm_to_vmem [thread:$0]  %s0, 32, %s15, [#allocation3]
    $region5: #{tpu_custom_call.1} parent=1 // pred_fallthru
      _
    // Predicated region
    $region6: #{tpu_custom_call.1} parent=1 // pred_check
      _
    $region7: #{tpu_custom_call.1} parent=1 // pred_check_branch
      %19 = sbr.rel (0) target = $region9
    $region8: #{tpu_custom_call.1} parent=1 // pred_region
      %20 = dma.done [#allocation3], 32
    $region9: #{tpu_custom_call.1} parent=1 // pred_fallthru
      _
    %v21 = vld [vmem:[#allocation2] sm:$0x3]
    %22 = vst [vmem:[#allocation5] sm:$0x3] %v21
    // Predicated region
    $region10: #{tpu_custom_call.1} parent=1 // pred_check
      _
    $region11: #{tpu_custom_call.1} parent=1 // pred_check_branch
      %24 = sbr.rel (0) target = $region13
    $region12: #{tpu_custom_call.1} parent=1 // pred_region
      %s26 = ssub.s32 32, 32
      %27 = vsyncadd [#allocation4], %s26
      %s29 = sshll.u32 [#allocation5], 4
      %s30 = int_to_ptr.vmem [resolvable:$true] %s29
      %32 = dma.vmem_to_hbm [thread:$0]  %s30, 32, %s1, [#allocation4]
    $region13: #{tpu_custom_call.1} parent=1 // pred_fallthru
      _
    // Predicated region
    $region14: #{tpu_custom_call.1} parent=1 // pred_check
      _
    $region15: #{tpu_custom_call.1} parent=1 // pred_check_branch
      %34 = sbr.rel (0) target = $region17
    $region16: #{tpu_custom_call.1} parent=1 // pred_region
      %35 = dma.done [#allocation4], 32
    $region17: #{tpu_custom_call.1} parent=1 // pred_fallthru
      _
    %36 = vsyncpa [#allocation3], 1
    %37 = vsyncpa [#allocation4], 1

</llo_original>
